<compile_context>
chip_gen: v7x
topology: tpu7x:2x2x1
jax: 0.10.0
libtpu: 0.0.40
codegen_flags: <defaults>
</compile_context>

<pallas_src>
import math

import jax
import jax.numpy as jnp
from jax.experimental import pallas as pl
from jax.experimental.pallas import tpu as pltpu

_LANES = 128           # vreg lane width -> full-lane, unmasked stores
_MAX_TILE_ROWS = 2048  # 2048 x 128 f32 = 1 MiB/block; 4 live buffers ~ 4 MiB


def _copy_kernel(w_ref, o_ref):
    # Forward pass: return the weight unchanged (identity copy of one tile).
    o_ref[...] = w_ref[...]


def input_model_forward(weight: jax.Array) -> jax.Array:
    """Pallas equivalent of InputModel.forward(): returns `weight`."""
    shape = weight.shape
    dtype = weight.dtype
    total = math.prod(shape)

    # Lane-dense 2D view: rows of 128 lanes, rows rounded up to a tile multiple.
    rows = pl.cdiv(total, _LANES)
    if rows >= _MAX_TILE_ROWS:
        tile_rows = _MAX_TILE_ROWS
    else:
        tile_rows = max(8, ((rows + 7) // 8) * 8)  # sublane-aligned
    n_tiles = pl.cdiv(rows, tile_rows)
    padded_rows = n_tiles * tile_rows
    padded_total = padded_rows * _LANES

    flat = jnp.ravel(weight)
    if padded_total != total:
        # General-shape fallback; the common NCHW parameter sizes hit the
        # no-pad path (reshape of a contiguous buffer is free in XLA).
        flat = jnp.pad(flat, (0, padded_total - total))
    flat2d = flat.reshape(padded_rows, _LANES)

    itemsize = jnp.dtype(dtype).itemsize
    out2d = pl.pallas_call(
        _copy_kernel,
        out_shape=jax.ShapeDtypeStruct((padded_rows, _LANES), dtype),
        grid=(n_tiles,),
        in_specs=[pl.BlockSpec((tile_rows, _LANES), lambda i: (i, 0))],
        out_specs=pl.BlockSpec((tile_rows, _LANES), lambda i: (i, 0)),
        compiler_params=pltpu.CompilerParams(
            dimension_semantics=("parallel",)),
        cost_estimate=pl.CostEstimate(
            flops=0,
            transcendentals=0,
            bytes_accessed=2 * padded_total * itemsize),
    )(flat2d)

    out_flat = out2d.reshape(padded_total)
    if padded_total != total:
        out_flat = out_flat[:total]
    return out_flat.reshape(shape)


def init_weight(in_shape, key):
    """Deterministic init matching torch.rand(in_shape) * 2 - 1  (U[-1, 1))."""
    # TODO(synk): matches the torch init in distribution only, not bit-for-bit.
    return jax.random.uniform(
        key, in_shape, dtype=jnp.float32, minval=-1.0, maxval=1.0
    )


if __name__ == "__main__":
    # Small shape consistent with a typical NCHW parameter tensor.
    in_shape = (2, 4, 16, 16)

    key = jax.random.PRNGKey(0)
    weight = init_weight(in_shape, key)

    forward = jax.jit(input_model_forward)
    out = forward(weight)
    out = jax.block_until_ready(out)

    # Sanity check: forward() must return the weight exactly.
    assert out.shape == weight.shape
    assert out.dtype == weight.dtype
    assert bool(jnp.all(out == weight))

    print("KERNEL_OK")
</pallas_src>

<mosaic_0001>
module attributes {stable_mosaic.version = 11 : i64} {
  func.func @_copy_kernel(%arg0: i32, %arg1: memref<16x128xf32, #tpu.memory_space<vmem>>, %arg2: memref<16x128xf32, #tpu.memory_space<vmem>>) attributes {dimension_semantics = [#tpu.dimension_semantics<parallel>], iteration_bounds = array<i64: 1>, scalar_prefetch = 0 : i64, scratch_operands = 0 : i64, tpu.core_type = #tpu.core_type<tc>, window_params = [{transform_indices = @transform_0, window_bounds = array<i64: 16, 128>}, {transform_indices = @transform_1, window_bounds = array<i64: 16, 128>}]} {
    %c0 = arith.constant 0 : index
    %c0_0 = arith.constant 0 : index
    %0 = vector.load %arg1[%c0, %c0_0] : memref<16x128xf32, #tpu.memory_space<vmem>>, vector<16x128xf32>
    %c0_1 = arith.constant 0 : index
    %c0_2 = arith.constant 0 : index
    %1 = vector.load %arg2[%c0_1, %c0_2] : memref<16x128xf32, #tpu.memory_space<vmem>>, vector<16x128xf32>
    tpu.vector_store %arg2[%c0_1, %c0_2], %0 {strides = array<i32>} : memref<16x128xf32, #tpu.memory_space<vmem>>, vector<16x128xf32>,
    return
  }
  func.func @transform_0(%arg0: i32) -> (i32, i32) {
    %c0_i32 = arith.constant 0 : i32
    %c0_i32_0 = arith.constant 0 : i32
    return %arg0, %c0_i32 : i32, i32
  }
  func.func @transform_1(%arg0: i32) -> (i32, i32) {
    %c0_i32 = arith.constant 0 : i32
    %c0_i32_0 = arith.constant 0 : i32
    return %arg0, %c0_i32 : i32, i32
  }
}

</mosaic_0001>

<llo_original>
// kernel: input_model_forward.1
$region0: #{input_model_forward.1}
  #allocation0 [shape = 'u32[]', space=smem, size = 0x4, offset = 0x4, fixed_abs, tag = 'smem constant byte address 0x4 - core index']
  #allocation1 [shape = 'u32[144,128]{1,0:T(1,128)}', space=vmem, size = 0x12000, scoped, tag = 'internal scratch']
  %s0 = inlined_call_operand.vmem [shape: f32[16,128], index: 0, kind: input, shape index: {}]
  %s1 = inlined_call_operand.vmem [shape: f32[16,128], index: 1, kind: output, shape index: {}]
  %s2 = sld [smem:[#allocation0]]
  $region14: #{input_model_forward.1} parent=0
    _
  %s4 = ssub.s32 1, %s2
  %s5 = scalar_select 0, %s4, %s2
  // Predicated region
  $region2: #{input_model_forward.1} parent=0 // pred_check
    _
  $region3: #{input_model_forward.1} parent=0 // pred_check_branch
    %7 = sbr.rel (0) target = $region5
  $region4: #{input_model_forward.1} parent=0 // pred_region
    _
  $region5: #{input_model_forward.1} parent=0 // pred_fallthru
    _
  %v8 = vld [vmem:[%s0] sm:$0xff]
  %v9 = vld [vmem:[%s0 + $0x8] sm:$0xff]
  %10 = vst [vmem:[%s1] sm:$0xff] %v8
  %11 = vst [vmem:[%s1 + $0x8] sm:$0xff] %v9
  // Predicated region
  $region6: #{input_model_forward.1} parent=0 // pred_check
    _
  $region7: #{input_model_forward.1} parent=0 // pred_check_branch
    %13 = sbr.rel (0) target = $region9
  $region8: #{input_model_forward.1} parent=0 // pred_region
    _
  $region9: #{input_model_forward.1} parent=0 // pred_fallthru
    _
  // Predicated region
  $region10: #{input_model_forward.1} parent=0 // pred_check
    _
  $region11: #{input_model_forward.1} parent=0 // pred_check_branch
    %15 = sbr.rel (0) target = $region13
  $region12: #{input_model_forward.1} parent=0 // pred_region
    _
  $region13: #{input_model_forward.1} parent=0 // pred_fallthru
    _

</llo_original>
